<compile_context>
chip_gen: v6e
topology: v6e:2x2x1
jax: 0.10.0
libtpu: 0.0.40
codegen_flags: <defaults>
</compile_context>

<pallas_src>
import functools

import jax
import jax.numpy as jnp
from jax.experimental import pallas as pl
from jax.experimental.pallas import tpu as pltpu

ENERGY_WEIGHT_1 = 1.0   # classifier 0 (n_classes > 1)
ENERGY_WEIGHT_2 = 0.5   # classifier 1 (n_classes == 1)
SIGMA = 0.1
_NEG = -1e30            # mask value for padded class rows in the logsumexp


def _round_up(x, m):
    return (x + m - 1) // m * m


def _choose_tile(B, D):
    """Pick the batch tile TB (lane-dense multiple of 128) and block count.

    * ~4 MiB target per z buffer, 16 MiB hard cap (2x-buffered tile must fit
      v7x's 64 MiB VMEM; also fine on v5e/v6e's 128 MiB).
    * TB capped at ceil(B/2) rounded to 128 so nb >= 2 and both v7x TCs stream.
    * For small B a single block equal to the full array dims (legal BlockSpec).
    """
    if B <= 256:
        return B, 1
    target = 4 * 1024 * 1024
    cap = 16 * 1024 * 1024
    tb = max(512, target // (4 * D))
    tb = min(tb, max(128, cap // (4 * D)))
    tb = max(128, (tb // 128) * 128)
    tb = min(tb, _round_up(pl.cdiv(B, 2), 128))
    return tb, pl.cdiv(B, tb)


def _ccf_kernel(z_ref, wt_ref, bc_ref, y1_ref, y2_ref, out_ref, *, n_classes):
    z = z_ref[...]                                            # (TB, D) f32

    # Fused logits for both heads, classes on sublanes / batch on lanes:
    # (C_pad, TB) = W_fused(C_pad, D) @ z(TB, D)^T.  Bias is pre-broadcast.
    logits = jax.lax.dot_general(
        wt_ref[...], z, (((1,), (1,)), ((), ())),
        preferred_element_type=jnp.float32) + bc_ref[...]     # (C_pad, TB)

    c_pad, tb = logits.shape
    row = jax.lax.broadcasted_iota(jnp.int32, (c_pad, tb), 0)  # class index

    # ---- classifier 0: gather via one-hot + masked logsumexp over real classes.
    y1 = y1_ref[...]                                           # (1, TB) int32
    picked = jnp.sum(jnp.where(row == y1, logits, 0.0),
                     axis=0, keepdims=True)                    # (1, TB)
    masked = jnp.where(row < n_classes, logits, _NEG)          # exclude head-1/pad
    m = jnp.max(masked, axis=0, keepdims=True)
    lse = m + jnp.log(jnp.sum(jnp.exp(masked - m), axis=0, keepdims=True))
    e1 = ENERGY_WEIGHT_1 * (picked - lse)                      # (1, TB)

    # ---- classifier 1 (n_classes == 1): static sublane slice of fused row C1.
    logits2 = logits[n_classes:n_classes + 1, :]               # (1, TB)
    diff = logits2 - y2_ref[...]
    e2 = ENERGY_WEIGHT_2 * (-(diff * diff) * 0.5 / (SIGMA ** 2))

    # ---- base term -0.5*||z||^2, lane-dense via ones-row MXU contraction.
    zz = z * z
    ones_row = jnp.ones((1, z.shape[1]), jnp.float32)
    znorm2 = jax.lax.dot_general(
        ones_row, zz, (((1,), (1,)), ((), ())),
        preferred_element_type=jnp.float32)                    # (1, TB)

    out_ref[...] = e1 + e2 - 0.5 * znorm2                      # lane-dense store


def ccf_forward(z, w1, b1, y1, w2, b2, y2):
    """CCF forward.  z:(B,D) f32, w1:(D,C1), b1:(1,C1), y1:(B,) int,
    w2:(D,1), b2:(1,1), y2:(B,) f32  ->  (B,) f32."""
    B, D = z.shape
    C1 = w1.shape[1]
    c_pad = _round_up(C1 + 1, 8)          # classifier-1 head fused into row C1

    tb, nb = _choose_tile(B, D)

    if z.dtype != jnp.float32:
        z = z.astype(jnp.float32)
    # TODO(synk): accept caller-provided bf16 z (keep f32 MXU accumulation) to
    # halve HBM traffic on the dominant tensor; casting here would add a pass.

    # Fused transposed weights: rows [0,C1) = classifier 0, row C1 = classifier 1.
    wt = jnp.zeros((c_pad, D), jnp.float32)
    wt = wt.at[:C1, :].set(jnp.transpose(w1.astype(jnp.float32)))
    wt = wt.at[C1, :].set(w2[:, 0].astype(jnp.float32))
    # Bias pre-broadcast to (c_pad, tb): no per-step lane broadcast in-kernel.
    bcol = jnp.zeros((c_pad,), jnp.float32)
    bcol = bcol.at[:C1].set(jnp.reshape(b1, (C1,)).astype(jnp.float32))
    bcol = bcol.at[C1].set(jnp.reshape(b2, ()).astype(jnp.float32))
    bc = jnp.broadcast_to(bcol[:, None], (c_pad, tb))

    # Labels lane-dense (1, B); ragged final block is handled by Pallas masking.
    y1_row = y1.astype(jnp.int32).reshape(1, B)
    y2_row = y2.astype(jnp.float32).reshape(1, B)

    z_tile_bytes = tb * D * 4
    vmem_limit = int(min(64 << 20, max(32 << 20, 2 * z_tile_bytes + (8 << 20))))

    kernel = functools.partial(_ccf_kernel, n_classes=C1)
    cost = pl.CostEstimate(
        flops=2 * B * D * (c_pad + 1),
        transcendentals=B * c_pad,
        bytes_accessed=4 * (B * D + c_pad * D + c_pad * tb + 3 * B),
    )

    out = pl.pallas_call(
        kernel,
        out_shape=jax.ShapeDtypeStruct((1, B), jnp.float32),
        grid=(nb,),
        in_specs=[
            pl.BlockSpec((tb, D), lambda i: (i, 0)),       # z tile (streamed)
            pl.BlockSpec((c_pad, D), lambda i: (0, 0)),    # fused W^T (resident)
            pl.BlockSpec((c_pad, tb), lambda i: (0, 0)),   # pre-bcast bias
            pl.BlockSpec((1, tb), lambda i: (0, i)),       # y1 row (lane-dense)
            pl.BlockSpec((1, tb), lambda i: (0, i)),       # y2 row (lane-dense)
        ],
        out_specs=pl.BlockSpec((1, tb), lambda i: (0, i)),
        compiler_params=pltpu.CompilerParams(
            dimension_semantics=("parallel",),
            vmem_limit_bytes=vmem_limit,
        ),
        cost_estimate=cost,
    )(z, wt, bc, y1_row, y2_row)
    return out[0]                          # matches PyTorch's (B,) output


def ccf_reference(z, w1, b1, y1, w2, b2, y2):
    logits1 = z @ w1 + b1
    picked = jnp.take_along_axis(logits1, y1[:, None], axis=1)[:, 0]
    lse = jax.scipy.special.logsumexp(logits1, axis=1)
    e1 = ENERGY_WEIGHT_1 * (picked - lse)
    logits2 = z @ w2 + b2
    d = jnp.linalg.norm(logits2 - y2[:, None], axis=1)
    e2 = ENERGY_WEIGHT_2 * (-(d ** 2) * 0.5 / SIGMA ** 2)
    return e1 + e2 - 0.5 * jnp.sum(z * z, axis=1)


if __name__ == "__main__":
    def make_inputs(key, B, D, C1):
        ks = jax.random.split(key, 7)
        z = jax.random.normal(ks[0], (B, D), dtype=jnp.float32)
        w1 = 0.1 * jax.random.normal(ks[1], (D, C1), dtype=jnp.float32)
        b1 = 0.1 * jax.random.normal(ks[2], (1, C1), dtype=jnp.float32)
        y1 = jax.random.randint(ks[3], (B,), 0, C1, dtype=jnp.int32)
        w2 = 0.1 * jax.random.normal(ks[4], (D, 1), dtype=jnp.float32)
        b2 = 0.1 * jax.random.normal(ks[5], (1, 1), dtype=jnp.float32)
        y2 = jax.random.normal(ks[6], (B,), dtype=jnp.float32)
        return z, w1, b1, y1, w2, b2, y2

    root = jax.random.PRNGKey(0)
    k_small, k_grid = jax.random.split(root, 2)

    # Small single-block case (B=8, D=32, C1=10).
    args = make_inputs(k_small, 8, 32, 10)
    out = ccf_forward(*args)
    jax.block_until_ready(out)
    ref = ccf_reference(*args)
    assert out.shape == (8,)
    assert jnp.allclose(out, ref, atol=1e-3, rtol=1e-3), (out, ref)

    # Multi-block case exercising the batch grid + a ragged final block
    # (B=300 -> 2 tiles of 256, no host-side padding of z).
    args2 = make_inputs(k_grid, 300, 128, 10)
    out2 = ccf_forward(*args2)
    jax.block_until_ready(out2)
    ref2 = ccf_reference(*args2)
    assert out2.shape == (300,)
    assert jnp.allclose(out2, ref2, atol=1e-3, rtol=1e-3), (out2, ref2)

    print("KERNEL_OK")
</pallas_src>

<mosaic_0001>
module attributes {stable_mosaic.version = 11 : i64} {
  func.func @_ccf_kernel(%arg0: i32, %arg1: memref<8x32xf32, #tpu.memory_space<vmem>>, %arg2: memref<16x32xf32, #tpu.memory_space<vmem>>, %arg3: memref<16x8xf32, #tpu.memory_space<vmem>>, %arg4: memref<1x8xi32, #tpu.memory_space<vmem>>, %arg5: memref<1x8xf32, #tpu.memory_space<vmem>>, %arg6: memref<1x8xf32, #tpu.memory_space<vmem>>) attributes {dimension_semantics = [#tpu.dimension_semantics<parallel>], iteration_bounds = array<i64: 1>, scalar_prefetch = 0 : i64, scratch_operands = 0 : i64, tpu.core_type = #tpu.core_type<tc>, window_params = [{transform_indices = @transform_0, window_bounds = array<i64: 8, 32>}, {pipeline_mode = #tpu.pipeline_mode<synchronous>, transform_indices = @transform_1, window_bounds = array<i64: 16, 32>}, {pipeline_mode = #tpu.pipeline_mode<synchronous>, transform_indices = @transform_2, window_bounds = array<i64: 16, 8>}, {transform_indices = @transform_3, window_bounds = array<i64: 1, 8>}, {transform_indices = @transform_4, window_bounds = array<i64: 1, 8>}, {transform_indices = @transform_5, window_bounds = array<i64: 1, 8>}]} {
    %c0 = arith.constant 0 : index
    %c0_0 = arith.constant 0 : index
    %0 = vector.load %arg1[%c0, %c0_0] : memref<8x32xf32, #tpu.memory_space<vmem>>, vector<8x32xf32>
    %c0_1 = arith.constant 0 : index
    %c0_2 = arith.constant 0 : index
    %1 = vector.load %arg2[%c0_1, %c0_2] : memref<16x32xf32, #tpu.memory_space<vmem>>, vector<16x32xf32>
    %cst = arith.constant dense<0.000000e+00> : vector<16x8xf32>
    %2 = tpu.matmul %1, %0, %cst {dimension_numbers = #tpu.dot_dimension_numbers<[1], [1], [0], [0], [0, 0, 1, 0], [], []>} : vector<16x32xf32>, vector<8x32xf32>, vector<16x8xf32> -> vector<16x8xf32>
    %c0_3 = arith.constant 0 : index
    %c0_4 = arith.constant 0 : index
    %3 = vector.load %arg3[%c0_3, %c0_4] : memref<16x8xf32, #tpu.memory_space<vmem>>, vector<16x8xf32>
    %4 = arith.addf %2, %3 : vector<16x8xf32>
    %5 = tpu.iota {dimensions = array<i32: 0>} : vector<16x8xi32>
    %c0_5 = arith.constant 0 : index
    %c0_6 = arith.constant 0 : index
    %6 = vector.load %arg4[%c0_5, %c0_6] : memref<1x8xi32, #tpu.memory_space<vmem>>, vector<1x8xi32>
    %7 = vector.broadcast %6 : vector<1x8xi32> to vector<16x8xi32>
    %8 = arith.cmpi eq, %5, %7 : vector<16x8xi32>
    %cst_7 = arith.constant 0.000000e+00 : f32
    %9 = vector.broadcast %cst_7 : f32 to vector<16x8xf32>
    %10 = arith.select %8, %4, %9 : vector<16x8xi1>, vector<16x8xf32>
    %cst_8 = arith.constant dense<0.000000e+00> : vector<8xf32>
    %11 = vector.multi_reduction <add>, %10, %cst_8 [0] : vector<16x8xf32> to vector<8xf32>
    %12 = vector.shape_cast %11 : vector<8xf32> to vector<1x8xf32>
    %c10_i32 = arith.constant 10 : i32
    %13 = vector.broadcast %c10_i32 : i32 to vector<16x8xi32>
    %14 = arith.cmpi slt, %5, %13 : vector<16x8xi32>
    %cst_9 = arith.constant -1.000000e+30 : f32
    %15 = vector.broadcast %cst_9 : f32 to vector<16x8xf32>
    %16 = arith.select %14, %4, %15 : vector<16x8xi1>, vector<16x8xf32>
    %cst_10 = arith.constant dense<0xFF800000> : vector<8xf32>
    %17 = vector.multi_reduction <maximumf>, %16, %cst_10 [0] : vector<16x8xf32> to vector<8xf32>
    %18 = vector.shape_cast %17 : vector<8xf32> to vector<1x8xf32>
    %19 = vector.broadcast %18 : vector<1x8xf32> to vector<16x8xf32>
    %20 = arith.subf %16, %19 : vector<16x8xf32>
    %21 = math.exp %20 : vector<16x8xf32>
    %cst_11 = arith.constant dense<0.000000e+00> : vector<8xf32>
    %22 = vector.multi_reduction <add>, %21, %cst_11 [0] : vector<16x8xf32> to vector<8xf32>
    %23 = vector.shape_cast %22 : vector<8xf32> to vector<1x8xf32>
    %24 = math.log %23 : vector<1x8xf32>
    %25 = arith.addf %18, %24 : vector<1x8xf32>
    %26 = arith.subf %12, %25 : vector<1x8xf32>
    %cst_12 = arith.constant 1.000000e+00 : f32
    %27 = vector.broadcast %cst_12 : f32 to vector<1x8xf32>
    %28 = arith.mulf %27, %26 : vector<1x8xf32>
    %29 = vector.extract_strided_slice %4 {offsets = [10, 0], sizes = [1, 8], strides = [1, 1]} : vector<16x8xf32> to vector<1x8xf32>
    %c0_13 = arith.constant 0 : index
    %c0_14 = arith.constant 0 : index
    %30 = vector.load %arg5[%c0_13, %c0_14] : memref<1x8xf32, #tpu.memory_space<vmem>>, vector<1x8xf32>
    %31 = arith.subf %29, %30 : vector<1x8xf32>
    %32 = arith.mulf %31, %31 : vector<1x8xf32>
    %cst_15 = arith.constant 0.000000e+00 : f32
    %33 = vector.broadcast %cst_15 : f32 to vector<1x8xf32>
    %34 = arith.subf %33, %32 : vector<1x8xf32>
    %cst_16 = arith.constant 5.000000e-01 : f32
    %35 = vector.broadcast %cst_16 : f32 to vector<1x8xf32>
    %36 = arith.mulf %34, %35 : vector<1x8xf32>
    %cst_17 = arith.constant 0.00999999977 : f32
    %37 = vector.broadcast %cst_17 : f32 to vector<1x8xf32>
    %38 = arith.divf %36, %37 : vector<1x8xf32>
    %cst_18 = arith.constant 5.000000e-01 : f32
    %39 = vector.broadcast %cst_18 : f32 to vector<1x8xf32>
    %40 = arith.mulf %39, %38 : vector<1x8xf32>
    %41 = arith.mulf %0, %0 : vector<8x32xf32>
    %cst_19 = arith.constant 1.000000e+00 : f32
    %42 = vector.broadcast %cst_19 : f32 to vector<1x32xf32>
    %cst_20 = arith.constant dense<0.000000e+00> : vector<1x8xf32>
    %43 = tpu.matmul %42, %41, %cst_20 {dimension_numbers = #tpu.dot_dimension_numbers<[1], [1], [0], [0], [0, 0, 1, 0], [], []>} : vector<1x32xf32>, vector<8x32xf32>, vector<1x8xf32> -> vector<1x8xf32>
    %44 = arith.addf %28, %40 : vector<1x8xf32>
    %cst_21 = arith.constant 5.000000e-01 : f32
    %45 = vector.broadcast %cst_21 : f32 to vector<1x8xf32>
    %46 = arith.mulf %45, %43 : vector<1x8xf32>
    %47 = arith.subf %44, %46 : vector<1x8xf32>
    %c0_22 = arith.constant 0 : index
    %c0_23 = arith.constant 0 : index
    %48 = vector.load %arg6[%c0_22, %c0_23] : memref<1x8xf32, #tpu.memory_space<vmem>>, vector<1x8xf32>
    tpu.vector_store %arg6[%c0_22, %c0_23], %47 {strides = array<i32>} : memref<1x8xf32, #tpu.memory_space<vmem>>, vector<1x8xf32>,
    return
  }
  func.func @transform_0(%arg0: i32) -> (i32, i32) {
    %c0_i32 = arith.constant 0 : i32
    %c0_i32_0 = arith.constant 0 : i32
    return %arg0, %c0_i32 : i32, i32
  }
  func.func @transform_1(%arg0: i32) -> (i32, i32) {
    %c0_i32 = arith.constant 0 : i32
    %c0_i32_0 = arith.constant 0 : i32
    %c0_i32_1 = arith.constant 0 : i32
    return %c0_i32, %c0_i32_0 : i32, i32
  }
  func.func @transform_2(%arg0: i32) -> (i32, i32) {
    %c0_i32 = arith.constant 0 : i32
    %c0_i32_0 = arith.constant 0 : i32
    %c0_i32_1 = arith.constant 0 : i32
    return %c0_i32, %c0_i32_0 : i32, i32
  }
  func.func @transform_3(%arg0: i32) -> (i32, i32) {
    %c0_i32 = arith.constant 0 : i32
    %c0_i32_0 = arith.constant 0 : i32
    return %c0_i32, %arg0 : i32, i32
  }
  func.func @transform_4(%arg0: i32) -> (i32, i32) {
    %c0_i32 = arith.constant 0 : i32
    %c0_i32_0 = arith.constant 0 : i32
    return %c0_i32, %arg0 : i32, i32
  }
  func.func @transform_5(%arg0: i32) -> (i32, i32) {
    %c0_i32 = arith.constant 0 : i32
    %c0_i32_0 = arith.constant 0 : i32
    return %c0_i32, %arg0 : i32, i32
  }
}

</mosaic_0001>

<llo_original>
// kernel: tpu_custom_call.1
$region0: #{tpu_custom_call.1}
  #allocation0 [shape = 'u32[]', space=smem, size = 0x4, offset = 0x4, fixed_abs, tag = 'smem constant byte address 0x4 - core index']
  #allocation1 [shape = 'u32[144,128]{1,0:T(1,128)}', space=vmem, size = 0x12000, scoped, tag = 'internal scratch']
  %s0 = inlined_call_operand.vmem [shape: f32[8,32], index: 0, kind: input, shape index: {}]
  %s1 = inlined_call_operand.vmem [shape: f32[16,32], index: 1, kind: input, shape index: {}]
  %s2 = inlined_call_operand.vmem [shape: f32[16,8], index: 2, kind: input, shape index: {}]
  %s3 = inlined_call_operand.vmem [shape: s32[1,8], index: 3, kind: input, shape index: {}]
  %s4 = inlined_call_operand.vmem [shape: f32[1,8], index: 4, kind: input, shape index: {}]
  %s5 = inlined_call_operand.hbm [shape: f32[1,8], index: 5, kind: output, shape index: {}]
  %s6 = sld [smem:[#allocation0]]
  $region30: #{tpu_custom_call.1} parent=0
    _
  %s8 = ssub.s32 1, %s6
  %s9 = scalar_select 0, %s8, %s6
  $region1: #{tpu_custom_call.1} parent=0
    #allocation2 [shape = 'u8[512]{0}', space=vmem, size = 0x400, scoped, tag = 'output window, operand 0, single buffered']
    #allocation3 [shape = 's32[1]{0}', space=sflag, size = 0x4, scoped, tag = 'scoped memory for tpu_custom_call.1']
    %10 = vsyncpa [#allocation3], 0
    // Predicated region
    $region2: #{tpu_custom_call.1} parent=1 // pred_check
      _
    $region3: #{tpu_custom_call.1} parent=1 // pred_check_branch
      %12 = sbr.rel (0) target = $region5
    $region4: #{tpu_custom_call.1} parent=1 // pred_region
      _
    $region5: #{tpu_custom_call.1} parent=1 // pred_fallthru
      _
    // Predicated region
    $region6: #{tpu_custom_call.1} parent=1 // pred_check
      _
    $region7: #{tpu_custom_call.1} parent=1 // pred_check_branch
      %14 = sbr.rel (0) target = $region9
    $region8: #{tpu_custom_call.1} parent=1 // pred_region
      _
    $region9: #{tpu_custom_call.1} parent=1 // pred_fallthru
      _
    // Predicated region
    $region10: #{tpu_custom_call.1} parent=1 // pred_check
      _
    $region11: #{tpu_custom_call.1} parent=1 // pred_check_branch
      %16 = sbr.rel (0) target = $region13
    $region12: #{tpu_custom_call.1} parent=1 // pred_region
      _
    $region13: #{tpu_custom_call.1} parent=1 // pred_fallthru
      _
    // Predicated region
    $region14: #{tpu_custom_call.1} parent=1 // pred_check
      _
    $region15: #{tpu_custom_call.1} parent=1 // pred_check_branch
      %18 = sbr.rel (0) target = $region17
    $region16: #{tpu_custom_call.1} parent=1 // pred_region
      _
    $region17: #{tpu_custom_call.1} parent=1 // pred_fallthru
      _
    // Predicated region
    $region18: #{tpu_custom_call.1} parent=1 // pred_check
      _
    $region19: #{tpu_custom_call.1} parent=1 // pred_check_branch
      %20 = sbr.rel (0) target = $region21
    $region20: #{tpu_custom_call.1} parent=1 // pred_region
      _
    $region21: #{tpu_custom_call.1} parent=1 // pred_fallthru
      _
    %v21 = vld [vmem:[%s0] sm:$0xff]
    %v22 = vld [vmem:[%s1] sm:$0xff]
    %v23 = vld [vmem:[%s1 + $0x8] sm:$0xff]
    %v24 = vld [vmem:[%s2] sm:$0xff]
    %v25 = vld [vmem:[%s2 + $0x8] sm:$0xff]
    %vm26 = vcmask 261120
    %v28 = vsel %vm26, %v22, 0
    %v31 = vsel %vm26, %v23, 0
    %v34 = vsel %vm26, %v21, 0
    %36 = vmatprep.subr.mxu0 0.0
    %37 = vmatpush1.xpose.msra.mxu0 0.0
    %38 = vmatprep.subr.mxu0 0.0
    %39 = vmatpush1.xpose.msra.mxu0 0.0
    %40 = vmatprep.subr.mxu0 0.0
    %41 = vmatpush1.xpose.msra.mxu0 0.0
    %42 = vmatprep.subr.mxu0 0.0
    %43 = vmatpush1.xpose.msra.mxu0 0.0
    %44 = vmatprep.subr.mxu0 0.0
    %45 = vmatpush1.xpose.msra.mxu0 0.0
    %46 = vmatprep.subr.mxu0 0.0
    %47 = vmatpush1.xpose.msra.mxu0 0.0
    %48 = vmatprep.subr.mxu0 0.0
    %49 = vmatpush1.xpose.msra.mxu0 0.0
    %50 = vmatprep.subr.mxu0 0.0
    %51 = vmatpush1.xpose.msra.mxu0 0.0
    %52 = vmatprep.subr.mxu0 0.0
    %53 = vmatpush1.xpose.msra.mxu0 0.0
    %54 = vmatprep.subr.mxu0 0.0
    %55 = vmatpush1.xpose.msra.mxu0 0.0
    %56 = vmatprep.subr.mxu0 0.0
    %57 = vmatpush1.xpose.msra.mxu0 0.0
    %58 = vmatprep.subr.mxu0 0.0
    %59 = vmatpush1.xpose.msra.mxu0 0.0
    %60 = vmatprep.subr.mxu0 0.0
    %61 = vmatpush1.xpose.msra.mxu0 0.0
    %62 = vmatprep.subr.mxu0 0.0
    %63 = vmatpush1.xpose.msra.mxu0 0.0
    %64 = vmatprep.subr.mxu0 0.0
    %65 = vmatpush1.xpose.msra.mxu0 0.0
    %66 = vmatprep.subr.mxu0 0.0
    %67 = vmatpush1.xpose.msra.mxu0 %v34
    %68 = vmatprep.subr.mxu0 0.0
    %69 = vmatpush2.xpose.msra.mxu0 0.0
    %70 = vmatprep.subr.mxu0 0.0
    %71 = vmatpush2.xpose.msra.mxu0 0.0
    %72 = vmatprep.subr.mxu0 0.0
    %73 = vmatpush2.xpose.msra.mxu0 0.0
    %74 = vmatprep.subr.mxu0 0.0
    %75 = vmatpush2.xpose.msra.mxu0 0.0
    %76 = vmatprep.subr.mxu0 0.0
    %77 = vmatpush2.xpose.msra.mxu0 0.0
    %78 = vmatprep.subr.mxu0 0.0
    %79 = vmatpush2.xpose.msra.mxu0 0.0
    %80 = vmatprep.subr.mxu0 0.0
    %81 = vmatpush2.xpose.msra.mxu0 0.0
    %82 = vmatprep.subr.mxu0 0.0
    %83 = vmatpush2.xpose.msra.mxu0 0.0
    %84 = vmatprep.subr.mxu0 0.0
    %85 = vmatpush2.xpose.msra.mxu0 0.0
    %86 = vmatprep.subr.mxu0 0.0
    %87 = vmatpush2.xpose.msra.mxu0 0.0
    %88 = vmatprep.subr.mxu0 0.0
    %89 = vmatpush2.xpose.msra.mxu0 0.0
    %90 = vmatprep.subr.mxu0 0.0
    %91 = vmatpush2.xpose.msra.mxu0 0.0
    %92 = vmatprep.subr.mxu0 0.0
    %93 = vmatpush2.xpose.msra.mxu0 0.0
    %94 = vmatprep.subr.mxu0 0.0
    %95 = vmatpush2.xpose.msra.mxu0 0.0
    %96 = vmatprep.subr.mxu0 0.0
    %97 = vmatpush2.xpose.msra.mxu0 0.0
    %98 = vmatprep.subr.mxu0 0.0
    %99 = vmatpush2.xpose.msra.mxu0 0.0
    %100 = vmatprep.mubr.f32.mxu0 0.0
    %101 = vmatmul.mubr.f32.gmra.mxu0 %v28
    %v102 = vpop.f32.mrf.mxu0
    %v103 = vadd.f32 %v24, %v102
    %v104 = vpop.f32.mrf.mxu0
    %105 = vmatprep.mubr.f32.mxu0 0.0
    %106 = vmatmul.mubr.f32.gmra.mxu0 %v31
    %v107 = vpop.f32.mrf.mxu0
    %v108 = vadd.f32 %v25, %v107
    %v109 = vpop.f32.mrf.mxu0
    %110 = vdwg.mxu0
    %v111 = vlaneseq
    %v112 = vshrl.u32 %v111, 7
    %v113 = vadd.s32 %v112, 8
    %v114 = vld [vmem:[%s3] sm:$0x1]
    %v115 = vlaneseq
    %v116 = vshrl.u32 %v115, 7
    %v117 = vsub.s32 0, %v116
    %v118 = vrot.slane %v114, %v117
    %vm119 = vcmp.eq.s32.totalorder %v112, %v118
    %vm120 = vcmp.eq.s32.totalorder %v113, %v118
    %v121 = vsel %vm119, %v103, 0.0
    %v122 = vsel %vm120, %v108, 0.0
    %vm123 = vcmask 64512
    %v124 = vsel %vm123, %v121, 0.0
    %v125 = vsel %vm123, %v122, 0.0
    %v126 = vadd.f32 %v124, %v125
    %v127 = vrot.slane %v126, 4
    %v128 = vadd.f32 %v126, %v127
    %v129 = vrot.slane %v128, 2
    %v130 = vadd.f32 %v128, %v129
    %v131 = vrot.slane %v130, 1
    %v132 = vadd.f32 %v130, %v131
    %vm133 = vcmp.lt.s32.totalorder %v112, 10
    %vm134 = vcmp.lt.s32.totalorder %v113, 10
    %v135 = vsel %vm133, %v103, -1e+30
    %v136 = vsel %vm134, %v108, -1e+30
    %v137 = vsel %vm123, %v135, -inf
    %v138 = vsel %vm123, %v136, -inf
    %v139 = vmax.f32 %v137, %v138
    %v140 = vrot.slane %v139, 4
    %v141 = vmax.f32 %v139, %v140
    %v142 = vrot.slane %v141, 2
    %v143 = vmax.f32 %v141, %v142
    %v144 = vrot.slane %v143, 1
    %v145 = vmax.f32 %v143, %v144
    %v146 = vsub.f32 %v135, %v145
    %v147 = vsub.f32 %v136, %v145
    %v148 = vmul.f32 %v146, 1.442695
    %v149 = vpow.pop %v148
    %v150 = vmul.f32 %v147, 1.442695
    %v151 = vpow.pop %v150
    %v152 = vsel %vm123, %v149, 0.0
    %v153 = vsel %vm123, %v151, 0.0
    %v154 = vadd.f32 %v152, %v153
    %v155 = vrot.slane %v154, 4
    %v156 = vadd.f32 %v154, %v155
    %v157 = vrot.slane %v156, 2
    %v158 = vadd.f32 %v156, %v157
    %v159 = vrot.slane %v158, 1
    %v160 = vadd.f32 %v158, %v159
    %v161 = vlog2.pop %v160
    %v162 = vmul.f32 %v161, 0.6931472
    %v163 = vadd.f32 %v145, %v162
    %v164 = vsub.f32 %v132, %v163
    %v165 = vld [vmem:[%s4] sm:$0x1]
    %v167 = vlaneseq
    %v168 = vshrl.u32 %v167, 7
    %v169 = vsub.s32 0, %v168
    %v170 = vrot.slane %v165, %v169
    %v172 = vsub.f32 %v108, %v170
    %v173 = vmul.f32 %v172, %v172
    %v174 = vsub.f32 0.0, %v173
    %v175 = vmul.f32 %v174, 0.5
    %v176 = vrcp.pop 0.01
    %v177 = vmul.f32 %v175, %v176
    %v178 = vmul.f32 %v177, 0.5
    %v179 = vmul.f32 %v21, %v21
    %v181 = vsel %vm26, 1.0, 0
    %v184 = vsel %vm26, %v179, 0
    %186 = vmatprep.subr.mxu0 0.0
    %187 = vmatpush1.xpose.msra.mxu0 0.0
    %188 = vmatprep.subr.mxu0 0.0
    %189 = vmatpush1.xpose.msra.mxu0 0.0
    %190 = vmatprep.subr.mxu0 0.0
    %191 = vmatpush1.xpose.msra.mxu0 0.0
    %192 = vmatprep.subr.mxu0 0.0
    %193 = vmatpush1.xpose.msra.mxu0 0.0
    %194 = vmatprep.subr.mxu0 0.0
    %195 = vmatpush1.xpose.msra.mxu0 0.0
    %196 = vmatprep.subr.mxu0 0.0
    %197 = vmatpush1.xpose.msra.mxu0 0.0
    %198 = vmatprep.subr.mxu0 0.0
    %199 = vmatpush1.xpose.msra.mxu0 0.0
    %200 = vmatprep.subr.mxu0 0.0
    %201 = vmatpush1.xpose.msra.mxu0 0.0
    %202 = vmatprep.subr.mxu0 0.0
    %203 = vmatpush1.xpose.msra.mxu0 0.0
    %204 = vmatprep.subr.mxu0 0.0
    %205 = vmatpush1.xpose.msra.mxu0 0.0
    %206 = vmatprep.subr.mxu0 0.0
    %207 = vmatpush1.xpose.msra.mxu0 0.0
    %208 = vmatprep.subr.mxu0 0.0
    %209 = vmatpush1.xpose.msra.mxu0 0.0
    %210 = vmatprep.subr.mxu0 0.0
    %211 = vmatpush1.xpose.msra.mxu0 0.0
    %212 = vmatprep.subr.mxu0 0.0
    %213 = vmatpush1.xpose.msra.mxu0 0.0
    %214 = vmatprep.subr.mxu0 0.0
    %215 = vmatpush1.xpose.msra.mxu0 0.0
    %216 = vmatprep.subr.mxu0 0.0
    %217 = vmatpush1.xpose.msra.mxu0 %v184
    %218 = vmatprep.subr.mxu0 0.0
    %219 = vmatpush2.xpose.msra.mxu0 0.0
    %220 = vmatprep.subr.mxu0 0.0
    %221 = vmatpush2.xpose.msra.mxu0 0.0
    %222 = vmatprep.subr.mxu0 0.0
    %223 = vmatpush2.xpose.msra.mxu0 0.0
    %224 = vmatprep.subr.mxu0 0.0
    %225 = vmatpush2.xpose.msra.mxu0 0.0
    %226 = vmatprep.subr.mxu0 0.0
    %227 = vmatpush2.xpose.msra.mxu0 0.0
    %228 = vmatprep.subr.mxu0 0.0
    %229 = vmatpush2.xpose.msra.mxu0 0.0
    %230 = vmatprep.subr.mxu0 0.0
    %231 = vmatpush2.xpose.msra.mxu0 0.0
    %232 = vmatprep.subr.mxu0 0.0
    %233 = vmatpush2.xpose.msra.mxu0 0.0
    %234 = vmatprep.subr.mxu0 0.0
    %235 = vmatpush2.xpose.msra.mxu0 0.0
    %236 = vmatprep.subr.mxu0 0.0
    %237 = vmatpush2.xpose.msra.mxu0 0.0
    %238 = vmatprep.subr.mxu0 0.0
    %239 = vmatpush2.xpose.msra.mxu0 0.0
    %240 = vmatprep.subr.mxu0 0.0
    %241 = vmatpush2.xpose.msra.mxu0 0.0
    %242 = vmatprep.subr.mxu0 0.0
    %243 = vmatpush2.xpose.msra.mxu0 0.0
    %244 = vmatprep.subr.mxu0 0.0
    %245 = vmatpush2.xpose.msra.mxu0 0.0
    %246 = vmatprep.subr.mxu0 0.0
    %247 = vmatpush2.xpose.msra.mxu0 0.0
    %248 = vmatprep.subr.mxu0 0.0
    %249 = vmatpush2.xpose.msra.mxu0 0.0
    %250 = vmatprep.mubr.f32.mxu0 0.0
    %251 = vmatmul.mubr.f32.gmra.mxu0 %v181
    %v252 = vpop.f32.mrf.mxu0
    %v253 = vadd.f32 0.0, %v252
    %v254 = vpop.f32.mrf.mxu0
    %255 = vdwg.mxu0
    %v256 = vadd.f32 %v164, %v178
    %v257 = vmul.f32 %v253, 0.5
    %v259 = vrot.slane %v257, 6
    %v261 = vsub.f32 %v256, %v259
    %vm262 = vcmask 59394
    %263 = vst.msk [vmem:[#allocation2 - $0x2] sm:$0x4] %vm262, %v261
    // Predicated region
    $region22: #{tpu_custom_call.1} parent=1 // pred_check
      _
    $region23: #{tpu_custom_call.1} parent=1 // pred_check_branch
      %265 = sbr.rel (0) target = $region25
    $region24: #{tpu_custom_call.1} parent=1 // pred_region
      %s267 = ssub.s32 16, 16
      %268 = vsyncadd [#allocation3], %s267
      %s270 = sshll.u32 [#allocation2], 4
      %s271 = int_to_ptr.vmem [resolvable:$true] %s270
      %273 = dma.vmem_to_hbm [thread:$0]  %s271, 16, %s5, [#allocation3]
    $region25: #{tpu_custom_call.1} parent=1 // pred_fallthru
      _
    // Predicated region
    $region26: #{tpu_custom_call.1} parent=1 // pred_check
      _
    $region27: #{tpu_custom_call.1} parent=1 // pred_check_branch
      %275 = sbr.rel (0) target = $region29
    $region28: #{tpu_custom_call.1} parent=1 // pred_region
      %276 = dma.done [#allocation3], 16
    $region29: #{tpu_custom_call.1} parent=1 // pred_fallthru
      _
    %277 = vsyncpa [#allocation3], 1

</llo_original>
